<compile_context>
chip_gen: v5e
topology: v5e:2x2
jax: 0.10.0
libtpu: 0.0.40
codegen_flags: <defaults>
</compile_context>

<pallas_src>
import functools

import jax
import jax.numpy as jnp
from jax.experimental import pallas as pl
from jax.experimental.pallas import tpu as pltpu

FEAT = 128      # input feature width
LANE = 128      # lane-padded hidden/output width
OUT_DIM = 6     # true output width


def _mlp_kernel(x_ref, w1_ref, b1_ref, w2_ref, b2_ref,
                w3_ref, b3_ref, w4_ref, b4_ref, o_ref):
    # Hoist the tiny (1, 128) f32 biases once per grid step.
    b1 = b1_ref[...]
    b2 = b2_ref[...]
    b3 = b3_ref[...]
    b4 = b4_ref[...]

    # Cast the f32 activation tile to bf16 in-kernel (saves a wrapper-side HBM pass).
    h = x_ref[...].astype(jnp.bfloat16)

    # bf16 operands on the MXU, f32 accumulation; bias add + ReLU in f32.
    h = jnp.dot(h, w1_ref[...], preferred_element_type=jnp.float32)
    h = jnp.maximum(h + b1, 0.0).astype(jnp.bfloat16)

    h = jnp.dot(h, w2_ref[...], preferred_element_type=jnp.float32)
    h = jnp.maximum(h + b2, 0.0).astype(jnp.bfloat16)

    h = jnp.dot(h, w3_ref[...], preferred_element_type=jnp.float32)
    h = jnp.maximum(h + b3, 0.0).astype(jnp.bfloat16)   # padded lanes stay 0

    h = jnp.dot(h, w4_ref[...], preferred_element_type=jnp.float32)
    o_ref[...] = (h + b4).astype(o_ref.dtype)           # lane-dense (TM, 128) store


def _round_up(n, m):
    return (n + m - 1) // m * m


def init_params(key):
    """Matches the PyTorch init: weights ~ N(0, 0.05), biases ~ N(0, 0.1).
    PyTorch nn.Linear stores weight as (out, in); we store the transpose (in, out)."""
    dims = [(128, 128), (128, 128), (128, 64), (64, 6)]
    params = {}
    for i, (din, dout) in enumerate(dims, start=1):
        key, kw, kb = jax.random.split(key, 3)
        params[f"w{i}"] = 0.05 * jax.random.normal(kw, (din, dout), jnp.float32)
        params[f"b{i}"] = 0.10 * jax.random.normal(kb, (1, dout), jnp.float32)
    return params


def pack_params(params):
    """One-time host-side packing: cast weights to bf16 and zero-pad the narrow
    tail layers to 128 lanes. Done once, NOT per forward call."""
    w1 = params["w1"].astype(jnp.bfloat16)
    w2 = params["w2"].astype(jnp.bfloat16)
    w3 = jnp.zeros((FEAT, LANE), jnp.bfloat16).at[:, :64].set(
        params["w3"].astype(jnp.bfloat16))
    w4 = jnp.zeros((LANE, LANE), jnp.bfloat16).at[:64, :OUT_DIM].set(
        params["w4"].astype(jnp.bfloat16))
    b1 = params["b1"].astype(jnp.float32)
    b2 = params["b2"].astype(jnp.float32)
    b3 = jnp.zeros((1, LANE), jnp.float32).at[:, :64].set(params["b3"])
    b4 = jnp.zeros((1, LANE), jnp.float32).at[:, :OUT_DIM].set(params["b4"])
    return (w1, b1, w2, b2, w3, b3, w4, b4)


@functools.partial(jax.jit, static_argnames=("tm",))
def dar_model_forward(x, packed, *, tm=512):
    """x: (B, 128) float32. packed: output of pack_params. Returns (B, 6) float32."""
    B = x.shape[0]
    x = x.astype(jnp.float32)                # kernel expects f32; bf16 cast happens in-kernel
    tm_eff = min(tm, _round_up(B, 8))        # don't over-pad tiny batches
    bp = _round_up(B, tm_eff)
    if bp != B:
        x = jnp.pad(x, ((0, bp - B), (0, 0)))

    grid = (bp // tm_eff,)

    def resident(shape):
        # Full-array block with a constant index_map: stays VMEM-resident
        # across all grid steps (no per-step re-DMA).
        return pl.BlockSpec(shape, lambda i: (0, 0))

    in_specs = [
        pl.BlockSpec((tm_eff, FEAT), lambda i: (i, 0)),   # x: tiled over batch (f32)
        resident((FEAT, LANE)), resident((1, LANE)),      # w1, b1
        resident((FEAT, LANE)), resident((1, LANE)),      # w2, b2
        resident((FEAT, LANE)), resident((1, LANE)),      # w3, b3 (lane-padded)
        resident((LANE, LANE)), resident((1, LANE)),      # w4, b4 (lane-padded)
    ]
    out_specs = pl.BlockSpec((tm_eff, LANE), lambda i: (i, 0))

    weight_bytes = sum(int(a.size) * a.dtype.itemsize for a in packed)
    cost = pl.CostEstimate(
        flops=2 * bp * 4 * FEAT * LANE,               # 4 padded 128x128 matmuls/row
        transcendentals=0,
        bytes_accessed=bp * FEAT * 4 + bp * LANE * 4 + weight_bytes,
    )

    out = pl.pallas_call(
        _mlp_kernel,
        out_shape=jax.ShapeDtypeStruct((bp, LANE), jnp.float32),
        grid=grid,
        in_specs=in_specs,
        out_specs=out_specs,
        compiler_params=pltpu.CompilerParams(
            dimension_semantics=("parallel",)),
        cost_estimate=cost,
    )(x, *packed)

    return out[:B, :OUT_DIM]


def reference_forward(x, params):
    """Pure-JAX f32 reference matching the PyTorch forward."""
    h = x
    for i in range(1, 4):
        h = jnp.maximum(h @ params[f"w{i}"] + params[f"b{i}"], 0.0)
    return h @ params["w4"] + params["b4"]


if __name__ == "__main__":
    key = jax.random.PRNGKey(0)
    key, kx = jax.random.split(key)

    params = init_params(key)
    packed = pack_params(params)

    # Small-batch check (single grid step).
    B = 8
    x = jax.random.normal(kx, (B, FEAT), jnp.float32)
    out = jax.block_until_ready(dar_model_forward(x, packed))
    ref = reference_forward(x, params)
    assert out.shape == (B, OUT_DIM)
    # bf16 MXU path => relaxed tolerance vs. the f32 reference.
    assert jnp.allclose(out, ref, atol=3e-2, rtol=3e-2), float(
        jnp.max(jnp.abs(out - ref)))

    # Larger batch exercising the multi-step grid + padding path.
    key, kx2 = jax.random.split(key)
    B2 = 600
    x2 = jax.random.normal(kx2, (B2, FEAT), jnp.float32)
    out2 = jax.block_until_ready(dar_model_forward(x2, packed))
    ref2 = reference_forward(x2, params)
    assert out2.shape == (B2, OUT_DIM)
    assert jnp.allclose(out2, ref2, atol=3e-2, rtol=3e-2), float(
        jnp.max(jnp.abs(out2 - ref2)))

    print("KERNEL_OK")
</pallas_src>

<mosaic_0001>
module attributes {stable_mosaic.version = 11 : i64} {
  func.func @_mlp_kernel(%arg0: i32, %arg1: memref<8x128xf32, #tpu.memory_space<vmem>>, %arg2: memref<128x128xbf16, #tpu.memory_space<vmem>>, %arg3: memref<1x128xf32, #tpu.memory_space<vmem>>, %arg4: memref<128x128xbf16, #tpu.memory_space<vmem>>, %arg5: memref<1x128xf32, #tpu.memory_space<vmem>>, %arg6: memref<128x128xbf16, #tpu.memory_space<vmem>>, %arg7: memref<1x128xf32, #tpu.memory_space<vmem>>, %arg8: memref<128x128xbf16, #tpu.memory_space<vmem>>, %arg9: memref<1x128xf32, #tpu.memory_space<vmem>>, %arg10: memref<8x128xf32, #tpu.memory_space<vmem>>) attributes {dimension_semantics = [#tpu.dimension_semantics<parallel>], iteration_bounds = array<i64: 1>, scalar_prefetch = 0 : i64, scratch_operands = 0 : i64, tpu.core_type = #tpu.core_type<tc>, window_params = [{transform_indices = @transform_0, window_bounds = array<i64: 8, 128>}, {pipeline_mode = #tpu.pipeline_mode<synchronous>, transform_indices = @transform_1, window_bounds = array<i64: 128, 128>}, {pipeline_mode = #tpu.pipeline_mode<synchronous>, transform_indices = @transform_2, window_bounds = array<i64: 1, 128>}, {pipeline_mode = #tpu.pipeline_mode<synchronous>, transform_indices = @transform_3, window_bounds = array<i64: 128, 128>}, {pipeline_mode = #tpu.pipeline_mode<synchronous>, transform_indices = @transform_4, window_bounds = array<i64: 1, 128>}, {pipeline_mode = #tpu.pipeline_mode<synchronous>, transform_indices = @transform_5, window_bounds = array<i64: 128, 128>}, {pipeline_mode = #tpu.pipeline_mode<synchronous>, transform_indices = @transform_6, window_bounds = array<i64: 1, 128>}, {pipeline_mode = #tpu.pipeline_mode<synchronous>, transform_indices = @transform_7, window_bounds = array<i64: 128, 128>}, {pipeline_mode = #tpu.pipeline_mode<synchronous>, transform_indices = @transform_8, window_bounds = array<i64: 1, 128>}, {transform_indices = @transform_9, window_bounds = array<i64: 8, 128>}]} {
    %c0 = arith.constant 0 : index
    %c0_0 = arith.constant 0 : index
    %0 = vector.load %arg3[%c0, %c0_0] : memref<1x128xf32, #tpu.memory_space<vmem>>, vector<1x128xf32>
    %c0_1 = arith.constant 0 : index
    %c0_2 = arith.constant 0 : index
    %1 = vector.load %arg5[%c0_1, %c0_2] : memref<1x128xf32, #tpu.memory_space<vmem>>, vector<1x128xf32>
    %c0_3 = arith.constant 0 : index
    %c0_4 = arith.constant 0 : index
    %2 = vector.load %arg7[%c0_3, %c0_4] : memref<1x128xf32, #tpu.memory_space<vmem>>, vector<1x128xf32>
    %c0_5 = arith.constant 0 : index
    %c0_6 = arith.constant 0 : index
    %3 = vector.load %arg9[%c0_5, %c0_6] : memref<1x128xf32, #tpu.memory_space<vmem>>, vector<1x128xf32>
    %c0_7 = arith.constant 0 : index
    %c0_8 = arith.constant 0 : index
    %4 = vector.load %arg1[%c0_7, %c0_8] : memref<8x128xf32, #tpu.memory_space<vmem>>, vector<8x128xf32>
    %5 = arith.truncf %4 : vector<8x128xf32> to vector<8x128xbf16>
    %c0_9 = arith.constant 0 : index
    %c0_10 = arith.constant 0 : index
    %6 = vector.load %arg2[%c0_9, %c0_10] : memref<128x128xbf16, #tpu.memory_space<vmem>>, vector<128x128xbf16>
    %cst = arith.constant dense<0.000000e+00> : vector<8x128xf32>
    %7 = tpu.matmul %5, %6, %cst {dimension_numbers = #tpu.dot_dimension_numbers<[1], [0], [0], [1], [0, 0, 1, 1], [], []>} : vector<8x128xbf16>, vector<128x128xbf16>, vector<8x128xf32> -> vector<8x128xf32>
    %8 = vector.broadcast %0 : vector<1x128xf32> to vector<8x128xf32>
    %9 = arith.addf %7, %8 : vector<8x128xf32>
    %cst_11 = arith.constant 0.000000e+00 : f32
    %10 = vector.broadcast %cst_11 : f32 to vector<8x128xf32>
    %11 = arith.maximumf %9, %10 : vector<8x128xf32>
    %12 = arith.truncf %11 : vector<8x128xf32> to vector<8x128xbf16>
    %c0_12 = arith.constant 0 : index
    %c0_13 = arith.constant 0 : index
    %13 = vector.load %arg4[%c0_12, %c0_13] : memref<128x128xbf16, #tpu.memory_space<vmem>>, vector<128x128xbf16>
    %cst_14 = arith.constant dense<0.000000e+00> : vector<8x128xf32>
    %14 = tpu.matmul %12, %13, %cst_14 {dimension_numbers = #tpu.dot_dimension_numbers<[1], [0], [0], [1], [0, 0, 1, 1], [], []>} : vector<8x128xbf16>, vector<128x128xbf16>, vector<8x128xf32> -> vector<8x128xf32>
    %15 = vector.broadcast %1 : vector<1x128xf32> to vector<8x128xf32>
    %16 = arith.addf %14, %15 : vector<8x128xf32>
    %cst_15 = arith.constant 0.000000e+00 : f32
    %17 = vector.broadcast %cst_15 : f32 to vector<8x128xf32>
    %18 = arith.maximumf %16, %17 : vector<8x128xf32>
    %19 = arith.truncf %18 : vector<8x128xf32> to vector<8x128xbf16>
    %c0_16 = arith.constant 0 : index
    %c0_17 = arith.constant 0 : index
    %20 = vector.load %arg6[%c0_16, %c0_17] : memref<128x128xbf16, #tpu.memory_space<vmem>>, vector<128x128xbf16>
    %cst_18 = arith.constant dense<0.000000e+00> : vector<8x128xf32>
    %21 = tpu.matmul %19, %20, %cst_18 {dimension_numbers = #tpu.dot_dimension_numbers<[1], [0], [0], [1], [0, 0, 1, 1], [], []>} : vector<8x128xbf16>, vector<128x128xbf16>, vector<8x128xf32> -> vector<8x128xf32>
    %22 = vector.broadcast %2 : vector<1x128xf32> to vector<8x128xf32>
    %23 = arith.addf %21, %22 : vector<8x128xf32>
    %cst_19 = arith.constant 0.000000e+00 : f32
    %24 = vector.broadcast %cst_19 : f32 to vector<8x128xf32>
    %25 = arith.maximumf %23, %24 : vector<8x128xf32>
    %26 = arith.truncf %25 : vector<8x128xf32> to vector<8x128xbf16>
    %c0_20 = arith.constant 0 : index
    %c0_21 = arith.constant 0 : index
    %27 = vector.load %arg8[%c0_20, %c0_21] : memref<128x128xbf16, #tpu.memory_space<vmem>>, vector<128x128xbf16>
    %cst_22 = arith.constant dense<0.000000e+00> : vector<8x128xf32>
    %28 = tpu.matmul %26, %27, %cst_22 {dimension_numbers = #tpu.dot_dimension_numbers<[1], [0], [0], [1], [0, 0, 1, 1], [], []>} : vector<8x128xbf16>, vector<128x128xbf16>, vector<8x128xf32> -> vector<8x128xf32>
    %29 = vector.broadcast %3 : vector<1x128xf32> to vector<8x128xf32>
    %30 = arith.addf %28, %29 : vector<8x128xf32>
    %c0_23 = arith.constant 0 : index
    %c0_24 = arith.constant 0 : index
    %31 = vector.load %arg10[%c0_23, %c0_24] : memref<8x128xf32, #tpu.memory_space<vmem>>, vector<8x128xf32>
    tpu.vector_store %arg10[%c0_23, %c0_24], %30 {strides = array<i32>} : memref<8x128xf32, #tpu.memory_space<vmem>>, vector<8x128xf32>,
    return
  }
  func.func @transform_0(%arg0: i32) -> (i32, i32) {
    %c0_i32 = arith.constant 0 : i32
    %c0_i32_0 = arith.constant 0 : i32
    return %arg0, %c0_i32 : i32, i32
  }
  func.func @transform_1(%arg0: i32) -> (i32, i32) {
    %c0_i32 = arith.constant 0 : i32
    %c0_i32_0 = arith.constant 0 : i32
    %c0_i32_1 = arith.constant 0 : i32
    return %c0_i32, %c0_i32_0 : i32, i32
  }
  func.func @transform_2(%arg0: i32) -> (i32, i32) {
    %c0_i32 = arith.constant 0 : i32
    %c0_i32_0 = arith.constant 0 : i32
    %c0_i32_1 = arith.constant 0 : i32
    return %c0_i32, %c0_i32_0 : i32, i32
  }
  func.func @transform_3(%arg0: i32) -> (i32, i32) {
    %c0_i32 = arith.constant 0 : i32
    %c0_i32_0 = arith.constant 0 : i32
    %c0_i32_1 = arith.constant 0 : i32
    return %c0_i32, %c0_i32_0 : i32, i32
  }
  func.func @transform_4(%arg0: i32) -> (i32, i32) {
    %c0_i32 = arith.constant 0 : i32
    %c0_i32_0 = arith.constant 0 : i32
    %c0_i32_1 = arith.constant 0 : i32
    return %c0_i32, %c0_i32_0 : i32, i32
  }
  func.func @transform_5(%arg0: i32) -> (i32, i32) {
    %c0_i32 = arith.constant 0 : i32
    %c0_i32_0 = arith.constant 0 : i32
    %c0_i32_1 = arith.constant 0 : i32
    return %c0_i32, %c0_i32_0 : i32, i32
  }
  func.func @transform_6(%arg0: i32) -> (i32, i32) {
    %c0_i32 = arith.constant 0 : i32
    %c0_i32_0 = arith.constant 0 : i32
    %c0_i32_1 = arith.constant 0 : i32
    return %c0_i32, %c0_i32_0 : i32, i32
  }
  func.func @transform_7(%arg0: i32) -> (i32, i32) {
    %c0_i32 = arith.constant 0 : i32
    %c0_i32_0 = arith.constant 0 : i32
    %c0_i32_1 = arith.constant 0 : i32
    return %c0_i32, %c0_i32_0 : i32, i32
  }
  func.func @transform_8(%arg0: i32) -> (i32, i32) {
    %c0_i32 = arith.constant 0 : i32
    %c0_i32_0 = arith.constant 0 : i32
    %c0_i32_1 = arith.constant 0 : i32
    return %c0_i32, %c0_i32_0 : i32, i32
  }
  func.func @transform_9(%arg0: i32) -> (i32, i32) {
    %c0_i32 = arith.constant 0 : i32
    %c0_i32_0 = arith.constant 0 : i32
    return %arg0, %c0_i32 : i32, i32
  }
}

</mosaic_0001>

<llo_original>
// kernel: dar_model_forward.1
$region0: #{dar_model_forward.1}
  #allocation0 [shape = 'u32[]', space=smem, size = 0x4, offset = 0x4, fixed_abs, tag = 'smem constant byte address 0x4 - core index']
  #allocation1 [shape = 'u32[72,128]{1,0:T(1,128)}', space=vmem, size = 0x9000, scoped, tag = 'internal scratch']
  %s0 = inlined_call_operand.hbm [shape: f32[8,128], index: 0, kind: input, shape index: {}]
  %s1 = inlined_call_operand.hbm [shape: bf16[128,128], index: 1, kind: input, shape index: {}]
  %s2 = inlined_call_operand.vmem [shape: f32[1,128], index: 2, kind: input, shape index: {}]
  %s3 = inlined_call_operand.hbm [shape: bf16[128,128], index: 3, kind: input, shape index: {}]
  %s4 = inlined_call_operand.vmem [shape: f32[1,128], index: 4, kind: input, shape index: {}]
  %s5 = inlined_call_operand.hbm [shape: bf16[128,128], index: 5, kind: input, shape index: {}]
  %s6 = inlined_call_operand.vmem [shape: f32[1,128], index: 6, kind: input, shape index: {}]
  %s7 = inlined_call_operand.hbm [shape: bf16[128,128], index: 7, kind: input, shape index: {}]
  %s8 = inlined_call_operand.vmem [shape: f32[1,128], index: 8, kind: input, shape index: {}]
  %s9 = inlined_call_operand.hbm [shape: f32[8,128], index: 9, kind: output, shape index: {}]
  %s10 = sld [smem:[#allocation0]]
  $region66: #{dar_model_forward.1} parent=0
    _
  %s12 = ssub.s32 1, %s10
  %s13 = scalar_select 0, %s12, %s10
  $region1: #{dar_model_forward.1} parent=0
    #allocation2 [shape = 'u8[4096]{0}', space=vmem, size = 0x1000, scoped, tag = 'input window, operand 0, single buffered']
    #allocation3 [shape = 's32[1]{0}', space=sflag, size = 0x4, scoped, tag = 'scoped memory for dar_model_forward.1']
    #allocation4 [shape = 's32[1]{0}', space=sflag, size = 0x4, scoped, tag = 'scoped memory for dar_model_forward.1']
    #allocation5 [shape = 'u8[32768]{0}', space=vmem, size = 0x8000, scoped, tag = 'input window, operand 1, single buffered']
    #allocation6 [shape = 's32[1]{0}', space=sflag, size = 0x4, scoped, tag = 'scoped memory for dar_model_forward.1']
    #allocation7 [shape = 'u8[32768]{0}', space=vmem, size = 0x8000, scoped, tag = 'input window, operand 3, single buffered']
    #allocation8 [shape = 'u8[32768]{0}', space=vmem, size = 0x8000, scoped, tag = 'input window, operand 5, single buffered']
    #allocation9 [shape = 's32[1]{0}', space=sflag, size = 0x4, scoped, tag = 'scoped memory for dar_model_forward.1']
    #allocation10 [shape = 'u8[32768]{0}', space=vmem, size = 0x8000, scoped, tag = 'input window, operand 7, single buffered']
    #allocation11 [shape = 'u8[4096]{0}', space=vmem, size = 0x1000, scoped, tag = 'output window, operand 0, single buffered']
    %14 = vsyncpa [#allocation3], 0
    %15 = vsyncpa [#allocation6], 0
    %16 = vsyncpa [#allocation9], 0
    %17 = vsyncpa [#allocation4], 0
    // Predicated region
    $region2: #{dar_model_forward.1} parent=1 // pred_check
      _
    $region3: #{dar_model_forward.1} parent=1 // pred_check_branch
      %19 = sbr.rel (0) target = $region5
    $region4: #{dar_model_forward.1} parent=1 // pred_region
      %21 = vsyncadd [#allocation3], 0
      %s23 = sshll.u32 %s0, 4
      %s24 = int_to_ptr.hbm [resolvable:$true] %s23
      %s25 = sshll.u32 [#allocation2], 4
      %s26 = int_to_ptr.vmem [resolvable:$true] %s25
      %28 = dma.hbm_to_vmem [thread:$0]  %s24, 128, %s26, [#allocation3]
    $region5: #{dar_model_forward.1} parent=1 // pred_fallthru
      _
    // Predicated region
    $region6: #{dar_model_forward.1} parent=1 // pred_check
      _
    $region7: #{dar_model_forward.1} parent=1 // pred_check_branch
      %30 = sbr.rel (0) target = $region9
    $region8: #{dar_model_forward.1} parent=1 // pred_region
      %32 = vsyncadd [#allocation6], 0
      %s33 = sshll.u32 %s1, 4
      %s34 = int_to_ptr.hbm [resolvable:$true] %s33
      %s35 = sshll.u32 [#allocation5], 4
      %s36 = int_to_ptr.vmem [resolvable:$true] %s35
      %41 = dma.hbm_to_vmem [thread:$0]  %s34, 1024, %s36, [#allocation6], 64, 64, 4
    $region9: #{dar_model_forward.1} parent=1 // pred_fallthru
      _
    // Predicated region
    $region10: #{dar_model_forward.1} parent=1 // pred_check
      _
    $region11: #{dar_model_forward.1} parent=1 // pred_check_branch
      %43 = sbr.rel (0) target = $region13
    $region12: #{dar_model_forward.1} parent=1 // pred_region
      _
    $region13: #{dar_model_forward.1} parent=1 // pred_fallthru
      _
    // Predicated region
    $region14: #{dar_model_forward.1} parent=1 // pred_check
      _
    $region15: #{dar_model_forward.1} parent=1 // pred_check_branch
      %45 = sbr.rel (0) target = $region17
    $region16: #{dar_model_forward.1} parent=1 // pred_region
      %47 = vsyncadd [#allocation6], 0
      %s48 = sshll.u32 %s3, 4
      %s49 = int_to_ptr.hbm [resolvable:$true] %s48
      %s50 = sshll.u32 [#allocation7], 4
      %s51 = int_to_ptr.vmem [resolvable:$true] %s50
      %56 = dma.hbm_to_vmem [thread:$0]  %s49, 1024, %s51, [#allocation6], 64, 64, 4
    $region17: #{dar_model_forward.1} parent=1 // pred_fallthru
      _
    // Predicated region
    $region18: #{dar_model_forward.1} parent=1 // pred_check
      _
    $region19: #{dar_model_forward.1} parent=1 // pred_check_branch
      %58 = sbr.rel (0) target = $region21
    $region20: #{dar_model_forward.1} parent=1 // pred_region
      _
    $region21: #{dar_model_forward.1} parent=1 // pred_fallthru
      _
    // Predicated region
    $region22: #{dar_model_forward.1} parent=1 // pred_check
      _
    $region23: #{dar_model_forward.1} parent=1 // pred_check_branch
      %60 = sbr.rel (0) target = $region25
    $region24: #{dar_model_forward.1} parent=1 // pred_region
      %62 = vsyncadd [#allocation9], 0
      %s63 = sshll.u32 %s5, 4
      %s64 = int_to_ptr.hbm [resolvable:$true] %s63
      %s65 = sshll.u32 [#allocation8], 4
      %s66 = int_to_ptr.vmem [resolvable:$true] %s65
      %71 = dma.hbm_to_vmem [thread:$0]  %s64, 1024, %s66, [#allocation9], 64, 64, 4
    $region25: #{dar_model_forward.1} parent=1 // pred_fallthru
      _
    // Predicated region
    $region26: #{dar_model_forward.1} parent=1 // pred_check
      _
    $region27: #{dar_model_forward.1} parent=1 // pred_check_branch
      %73 = sbr.rel (0) target = $region29
    $region28: #{dar_model_forward.1} parent=1 // pred_region
      _
    $region29: #{dar_model_forward.1} parent=1 // pred_fallthru
      _
    // Predicated region
    $region30: #{dar_model_forward.1} parent=1 // pred_check
      _
    $region31: #{dar_model_forward.1} parent=1 // pred_check_branch
      %75 = sbr.rel (0) target = $region33
    $region32: #{dar_model_forward.1} parent=1 // pred_region
      %77 = vsyncadd [#allocation9], 0
      %s78 = sshll.u32 %s7, 4
      %s79 = int_to_ptr.hbm [resolvable:$true] %s78
      %s80 = sshll.u32 [#allocation10], 4
      %s81 = int_to_ptr.vmem [resolvable:$true] %s80
      %86 = dma.hbm_to_vmem [thread:$0]  %s79, 1024, %s81, [#allocation9], 64, 64, 4
    $region33: #{dar_model_forward.1} parent=1 // pred_fallthru
      _
    // Predicated region
    $region34: #{dar_model_forward.1} parent=1 // pred_check
      _
    $region35: #{dar_model_forward.1} parent=1 // pred_check_branch
      %88 = sbr.rel (0) target = $region37
    $region36: #{dar_model_forward.1} parent=1 // pred_region
      _
    $region37: #{dar_model_forward.1} parent=1 // pred_fallthru
      _
    // Predicated region
    $region38: #{dar_model_forward.1} parent=1 // pred_check
      _
    $region39: #{dar_model_forward.1} parent=1 // pred_check_branch
      %90 = sbr.rel (0) target = $region41
    $region40: #{dar_model_forward.1} parent=1 // pred_region
      %92 = dma.done [#allocation3], 128
    $region41: #{dar_model_forward.1} parent=1 // pred_fallthru
      _
    // Predicated region
    $region42: #{dar_model_forward.1} parent=1 // pred_check
      _
    $region43: #{dar_model_forward.1} parent=1 // pred_check_branch
      %94 = sbr.rel (0) target = $region45
    $region44: #{dar_model_forward.1} parent=1 // pred_region
      %96 = dma.done [#allocation6], 1024
    $region45: #{dar_model_forward.1} parent=1 // pred_fallthru
      _
    // Predicated region
    $region46: #{dar_model_forward.1} parent=1 // pred_check
      _
    $region47: #{dar_model_forward.1} parent=1 // pred_check_branch
      %98 = sbr.rel (0) target = $region49
    $region48: #{dar_model_forward.1} parent=1 // pred_region
      %100 = dma.done [#allocation6], 1024
    $region49: #{dar_model_forward.1} parent=1 // pred_fallthru
      _
    // Predicated region
    $region50: #{dar_model_forward.1} parent=1 // pred_check
      _
    $region51: #{dar_model_forward.1} parent=1 // pred_check_branch
      %102 = sbr.rel (0) target = $region53
    $region52: #{dar_model_forward.1} parent=1 // pred_region
      %104 = dma.done [#allocation9], 1024
    $region53: #{dar_model_forward.1} parent=1 // pred_fallthru
      _
    // Predicated region
    $region54: #{dar_model_forward.1} parent=1 // pred_check
      _
    $region55: #{dar_model_forward.1} parent=1 // pred_check_branch
      %106 = sbr.rel (0) target = $region57
    $region56: #{dar_model_forward.1} parent=1 // pred_region
      %108 = dma.done [#allocation9], 1024
    $region57: #{dar_model_forward.1} parent=1 // pred_fallthru
      _
    %v109 = vld [vmem:[%s2] sm:$0x1]
    %v110 = vld [vmem:[%s4] sm:$0x1]
    %v111 = vld [vmem:[%s6] sm:$0x1]
    %v112 = vld [vmem:[%s8] sm:$0x1]
    %v113 = vld [vmem:[#allocation2] sm:$0xff]
    %v114 = vpack.c.bf16 %v113, %v113
    %v115 = vld [vmem:[#allocation5] sm:$0xf]
    %v116 = vld [vmem:[#allocation5 + $0x4] sm:$0xf]
    %v117 = vld [vmem:[#allocation5 + $0x8] sm:$0xf]
    %v118 = vld [vmem:[#allocation5 + $0xc] sm:$0xf]
    %v119 = vld [vmem:[#allocation5 + $0x10] sm:$0xf]
    %v120 = vld [vmem:[#allocation5 + $0x14] sm:$0xf]
    %v121 = vld [vmem:[#allocation5 + $0x18] sm:$0xf]
    %v122 = vld [vmem:[#allocation5 + $0x1c] sm:$0xf]
    %v123 = vld [vmem:[#allocation5 + $0x20] sm:$0xf]
    %v124 = vld [vmem:[#allocation5 + $0x24] sm:$0xf]
    %v125 = vld [vmem:[#allocation5 + $0x28] sm:$0xf]
    %v126 = vld [vmem:[#allocation5 + $0x2c] sm:$0xf]
    %v127 = vld [vmem:[#allocation5 + $0x30] sm:$0xf]
    %v128 = vld [vmem:[#allocation5 + $0x34] sm:$0xf]
    %v129 = vld [vmem:[#allocation5 + $0x38] sm:$0xf]
    %v130 = vld [vmem:[#allocation5 + $0x3c] sm:$0xf]
    %v132 = vperm.slane %v109, 0
    %v150 = vunpack.c.l.b16 %v115
    %v151 = vunpack.c.l.b16 %v116
    %v152 = vunpack.c.l.b16 %v117
    %v153 = vunpack.c.l.b16 %v118
    %v154 = vunpack.c.l.b16 %v119
    %v155 = vunpack.c.l.b16 %v120
    %v156 = vunpack.c.l.b16 %v121
    %v157 = vunpack.c.l.b16 %v122
    %v158 = vunpack.c.l.b16 %v123
    %v159 = vunpack.c.l.b16 %v124
    %v160 = vunpack.c.l.b16 %v125
    %v161 = vunpack.c.l.b16 %v126
    %v162 = vunpack.c.l.b16 %v127
    %v163 = vunpack.c.l.b16 %v128
    %v164 = vunpack.c.l.b16 %v129
    %v165 = vunpack.c.l.b16 %v130
    %v166 = vpack.c.b16 %v151, %v150
    %v167 = vpack.c.b16 %v153, %v152
    %v168 = vpack.c.b16 %v155, %v154
    %v169 = vpack.c.b16 %v157, %v156
    %v170 = vpack.c.b16 %v159, %v158
    %v171 = vpack.c.b16 %v161, %v160
    %v172 = vpack.c.b16 %v163, %v162
    %v173 = vpack.c.b16 %v165, %v164
    %182 = vmatpush.bf16.msra.mxu0 %v173
    %183 = vmatpush.bf16.msra.mxu0 %v172
    %184 = vmatpush.bf16.msra.mxu0 %v171
    %185 = vmatpush.bf16.msra.mxu0 %v170
    %186 = vmatpush.bf16.msra.mxu0 %v169
    %187 = vmatpush.bf16.msra.mxu0 %v168
    %188 = vmatpush.bf16.msra.mxu0 %v167
    %189 = vmatpush.bf16.msra.mxu0 %v166
    %190 = vmatmul.bf16.gmra.mxu0 %v114
    %v191 = vpop.f32.mrf.mxu0
    %v192 = vadd.f32 %v132, %v191
    %v193 = vpop.f32.mrf.mxu0
    %194 = vdwg.mxu0
    %v195 = vmax.f32 %v192, 0.0
    %v196 = vpack.c.bf16 %v195, %v195
    %v197 = vld [vmem:[#allocation7] sm:$0xf]
    %v198 = vld [vmem:[#allocation7 + $0x4] sm:$0xf]
    %v199 = vld [vmem:[#allocation7 + $0x8] sm:$0xf]
    %v200 = vld [vmem:[#allocation7 + $0xc] sm:$0xf]
    %v201 = vld [vmem:[#allocation7 + $0x10] sm:$0xf]
    %v202 = vld [vmem:[#allocation7 + $0x14] sm:$0xf]
    %v203 = vld [vmem:[#allocation7 + $0x18] sm:$0xf]
    %v204 = vld [vmem:[#allocation7 + $0x1c] sm:$0xf]
    %v205 = vld [vmem:[#allocation7 + $0x20] sm:$0xf]
    %v206 = vld [vmem:[#allocation7 + $0x24] sm:$0xf]
    %v207 = vld [vmem:[#allocation7 + $0x28] sm:$0xf]
    %v208 = vld [vmem:[#allocation7 + $0x2c] sm:$0xf]
    %v209 = vld [vmem:[#allocation7 + $0x30] sm:$0xf]
    %v210 = vld [vmem:[#allocation7 + $0x34] sm:$0xf]
    %v211 = vld [vmem:[#allocation7 + $0x38] sm:$0xf]
    %v212 = vld [vmem:[#allocation7 + $0x3c] sm:$0xf]
    %v214 = vperm.slane %v110, 0
    %v232 = vunpack.c.l.b16 %v197
    %v233 = vunpack.c.l.b16 %v198
    %v234 = vunpack.c.l.b16 %v199
    %v235 = vunpack.c.l.b16 %v200
    %v236 = vunpack.c.l.b16 %v201
    %v237 = vunpack.c.l.b16 %v202
    %v238 = vunpack.c.l.b16 %v203
    %v239 = vunpack.c.l.b16 %v204
    %v240 = vunpack.c.l.b16 %v205
    %v241 = vunpack.c.l.b16 %v206
    %v242 = vunpack.c.l.b16 %v207
    %v243 = vunpack.c.l.b16 %v208
    %v244 = vunpack.c.l.b16 %v209
    %v245 = vunpack.c.l.b16 %v210
    %v246 = vunpack.c.l.b16 %v211
    %v247 = vunpack.c.l.b16 %v212
    %v248 = vpack.c.b16 %v233, %v232
    %v249 = vpack.c.b16 %v235, %v234
    %v250 = vpack.c.b16 %v237, %v236
    %v251 = vpack.c.b16 %v239, %v238
    %v252 = vpack.c.b16 %v241, %v240
    %v253 = vpack.c.b16 %v243, %v242
    %v254 = vpack.c.b16 %v245, %v244
    %v255 = vpack.c.b16 %v247, %v246
    %264 = vmatpush.bf16.msra.mxu0 %v255
    %265 = vmatpush.bf16.msra.mxu0 %v254
    %266 = vmatpush.bf16.msra.mxu0 %v253
    %267 = vmatpush.bf16.msra.mxu0 %v252
    %268 = vmatpush.bf16.msra.mxu0 %v251
    %269 = vmatpush.bf16.msra.mxu0 %v250
    %270 = vmatpush.bf16.msra.mxu0 %v249
    %271 = vmatpush.bf16.msra.mxu0 %v248
    %272 = vmatmul.bf16.gmra.mxu0 %v196
    %v273 = vpop.f32.mrf.mxu0
    %v274 = vadd.f32 %v214, %v273
    %v275 = vpop.f32.mrf.mxu0
    %276 = vdwg.mxu0
    %v277 = vmax.f32 %v274, 0.0
    %v278 = vpack.c.bf16 %v277, %v277
    %v279 = vld [vmem:[#allocation8] sm:$0xf]
    %v280 = vld [vmem:[#allocation8 + $0x4] sm:$0xf]
    %v281 = vld [vmem:[#allocation8 + $0x8] sm:$0xf]
    %v282 = vld [vmem:[#allocation8 + $0xc] sm:$0xf]
    %v283 = vld [vmem:[#allocation8 + $0x10] sm:$0xf]
    %v284 = vld [vmem:[#allocation8 + $0x14] sm:$0xf]
    %v285 = vld [vmem:[#allocation8 + $0x18] sm:$0xf]
    %v286 = vld [vmem:[#allocation8 + $0x1c] sm:$0xf]
    %v287 = vld [vmem:[#allocation8 + $0x20] sm:$0xf]
    %v288 = vld [vmem:[#allocation8 + $0x24] sm:$0xf]
    %v289 = vld [vmem:[#allocation8 + $0x28] sm:$0xf]
    %v290 = vld [vmem:[#allocation8 + $0x2c] sm:$0xf]
    %v291 = vld [vmem:[#allocation8 + $0x30] sm:$0xf]
    %v292 = vld [vmem:[#allocation8 + $0x34] sm:$0xf]
    %v293 = vld [vmem:[#allocation8 + $0x38] sm:$0xf]
    %v294 = vld [vmem:[#allocation8 + $0x3c] sm:$0xf]
    %v296 = vperm.slane %v111, 0
    %v314 = vunpack.c.l.b16 %v279
    %v315 = vunpack.c.l.b16 %v280
    %v316 = vunpack.c.l.b16 %v281
    %v317 = vunpack.c.l.b16 %v282
    %v318 = vunpack.c.l.b16 %v283
    %v319 = vunpack.c.l.b16 %v284
    %v320 = vunpack.c.l.b16 %v285
    %v321 = vunpack.c.l.b16 %v286
    %v322 = vunpack.c.l.b16 %v287
    %v323 = vunpack.c.l.b16 %v288
    %v324 = vunpack.c.l.b16 %v289
    %v325 = vunpack.c.l.b16 %v290
    %v326 = vunpack.c.l.b16 %v291
    %v327 = vunpack.c.l.b16 %v292
    %v328 = vunpack.c.l.b16 %v293
    %v329 = vunpack.c.l.b16 %v294
    %v330 = vpack.c.b16 %v315, %v314
    %v331 = vpack.c.b16 %v317, %v316
    %v332 = vpack.c.b16 %v319, %v318
    %v333 = vpack.c.b16 %v321, %v320
    %v334 = vpack.c.b16 %v323, %v322
    %v335 = vpack.c.b16 %v325, %v324
    %v336 = vpack.c.b16 %v327, %v326
    %v337 = vpack.c.b16 %v329, %v328
    %346 = vmatpush.bf16.msra.mxu0 %v337
    %347 = vmatpush.bf16.msra.mxu0 %v336
    %348 = vmatpush.bf16.msra.mxu0 %v335
    %349 = vmatpush.bf16.msra.mxu0 %v334
    %350 = vmatpush.bf16.msra.mxu0 %v333
    %351 = vmatpush.bf16.msra.mxu0 %v332
    %352 = vmatpush.bf16.msra.mxu0 %v331
    %353 = vmatpush.bf16.msra.mxu0 %v330
    %354 = vmatmul.bf16.gmra.mxu0 %v278
    %v355 = vpop.f32.mrf.mxu0
    %v356 = vadd.f32 %v296, %v355
    %v357 = vpop.f32.mrf.mxu0
    %358 = vdwg.mxu0
    %v359 = vmax.f32 %v356, 0.0
    %v360 = vpack.c.bf16 %v359, %v359
    %v361 = vld [vmem:[#allocation10] sm:$0xf]
    %v362 = vld [vmem:[#allocation10 + $0x4] sm:$0xf]
    %v363 = vld [vmem:[#allocation10 + $0x8] sm:$0xf]
    %v364 = vld [vmem:[#allocation10 + $0xc] sm:$0xf]
    %v365 = vld [vmem:[#allocation10 + $0x10] sm:$0xf]
    %v366 = vld [vmem:[#allocation10 + $0x14] sm:$0xf]
    %v367 = vld [vmem:[#allocation10 + $0x18] sm:$0xf]
    %v368 = vld [vmem:[#allocation10 + $0x1c] sm:$0xf]
    %v369 = vld [vmem:[#allocation10 + $0x20] sm:$0xf]
    %v370 = vld [vmem:[#allocation10 + $0x24] sm:$0xf]
    %v371 = vld [vmem:[#allocation10 + $0x28] sm:$0xf]
    %v372 = vld [vmem:[#allocation10 + $0x2c] sm:$0xf]
    %v373 = vld [vmem:[#allocation10 + $0x30] sm:$0xf]
    %v374 = vld [vmem:[#allocation10 + $0x34] sm:$0xf]
    %v375 = vld [vmem:[#allocation10 + $0x38] sm:$0xf]
    %v376 = vld [vmem:[#allocation10 + $0x3c] sm:$0xf]
    %v378 = vperm.slane %v112, 0
    %v396 = vunpack.c.l.b16 %v361
    %v397 = vunpack.c.l.b16 %v362
    %v398 = vunpack.c.l.b16 %v363
    %v399 = vunpack.c.l.b16 %v364
    %v400 = vunpack.c.l.b16 %v365
    %v401 = vunpack.c.l.b16 %v366
    %v402 = vunpack.c.l.b16 %v367
    %v403 = vunpack.c.l.b16 %v368
    %v404 = vunpack.c.l.b16 %v369
    %v405 = vunpack.c.l.b16 %v370
    %v406 = vunpack.c.l.b16 %v371
    %v407 = vunpack.c.l.b16 %v372
    %v408 = vunpack.c.l.b16 %v373
    %v409 = vunpack.c.l.b16 %v374
    %v410 = vunpack.c.l.b16 %v375
    %v411 = vunpack.c.l.b16 %v376
    %v412 = vpack.c.b16 %v397, %v396
    %v413 = vpack.c.b16 %v399, %v398
    %v414 = vpack.c.b16 %v401, %v400
    %v415 = vpack.c.b16 %v403, %v402
    %v416 = vpack.c.b16 %v405, %v404
    %v417 = vpack.c.b16 %v407, %v406
    %v418 = vpack.c.b16 %v409, %v408
    %v419 = vpack.c.b16 %v411, %v410
    %428 = vmatpush.bf16.msra.mxu0 %v419
    %429 = vmatpush.bf16.msra.mxu0 %v418
    %430 = vmatpush.bf16.msra.mxu0 %v417
    %431 = vmatpush.bf16.msra.mxu0 %v416
    %432 = vmatpush.bf16.msra.mxu0 %v415
    %433 = vmatpush.bf16.msra.mxu0 %v414
    %434 = vmatpush.bf16.msra.mxu0 %v413
    %435 = vmatpush.bf16.msra.mxu0 %v412
    %436 = vmatmul.bf16.gmra.mxu0 %v360
    %v437 = vpop.f32.mrf.mxu0
    %v438 = vadd.f32 %v378, %v437
    %v439 = vpop.f32.mrf.mxu0
    %440 = vdwg.mxu0
    %441 = vst [vmem:[#allocation11] sm:$0xff] %v438
    // Predicated region
    $region58: #{dar_model_forward.1} parent=1 // pred_check
      _
    $region59: #{dar_model_forward.1} parent=1 // pred_check_branch
      %443 = sbr.rel (0) target = $region61
    $region60: #{dar_model_forward.1} parent=1 // pred_region
      %445 = vsyncadd [#allocation4], 0
      %s447 = sshll.u32 [#allocation11], 4
      %s448 = int_to_ptr.vmem [resolvable:$true] %s447
      %s449 = sshll.u32 %s9, 4
      %s450 = int_to_ptr.hbm [resolvable:$true] %s449
      %452 = dma.vmem_to_hbm [thread:$0]  %s448, 128, %s450, [#allocation4]
    $region61: #{dar_model_forward.1} parent=1 // pred_fallthru
      _
    // Predicated region
    $region62: #{dar_model_forward.1} parent=1 // pred_check
      _
    $region63: #{dar_model_forward.1} parent=1 // pred_check_branch
      %454 = sbr.rel (0) target = $region65
    $region64: #{dar_model_forward.1} parent=1 // pred_region
      %456 = dma.done [#allocation4], 128
    $region65: #{dar_model_forward.1} parent=1 // pred_fallthru
      _
    %457 = vsyncpa [#allocation3], 1
    %458 = vsyncpa [#allocation6], 1
    %459 = vsyncpa [#allocation9], 1
    %460 = vsyncpa [#allocation4], 1

</llo_original>
